<compile_context>
chip_gen: v6e
topology: v6e:2x2x1
jax: 0.10.0
libtpu: 0.0.40
codegen_flags: <defaults>
</compile_context>

<pallas_src>
import functools

import jax
import jax.numpy as jnp
from jax.experimental import pallas as pl
from jax.experimental.pallas import tpu as pltpu


def _round_up(v, m):
    return (v + m - 1) // m * m


def gin_layer_kernel(a_ref, x_ref, w1_ref, w2_ref, out_ref, *, normalize):
    """One GINConv layer on a row-stripe of nodes.

    a_ref : (tm, N_pad)     bf16   A_hat row stripe
    x_ref : (N_pad, D_pad)  bf16   full (padded) node features, resident
    w1/w2 : (D_pad, D_pad)  bf16   pre-transposed Linear weights, resident
    out   : (tm, D_pad)            layer output stripe (bf16 mid-layer, f32 final)
    """
    compute_dtype = w1_ref.dtype

    # Aggregate: (1+eps)*x_i + sum_{j in N(i)} x_j  ==  A_hat[stripe] @ x
    h = jnp.dot(a_ref[...], x_ref[...], preferred_element_type=jnp.float32)

    # MLP: Linear1 -> ReLU -> Linear2  (f32 accumulation, bf16 MXU feeds)
    h = jnp.dot(h.astype(compute_dtype), w1_ref[...],
                preferred_element_type=jnp.float32)
    h = jnp.maximum(h, 0.0)
    y = jnp.dot(h.astype(compute_dtype), w2_ref[...],
                preferred_element_type=jnp.float32)

    if normalize:
        # F.normalize(y, p=2, dim=1): y / max(||y||, 1e-12)  via rsqrt on the EUP.
        sumsq = jnp.sum(y * y, axis=1, keepdims=True)
        y = y * jax.lax.rsqrt(jnp.maximum(sumsq, jnp.float32(1e-24)))

    out_ref[...] = y.astype(out_ref.dtype)


def gin_gae_forward(x, edge_index, w1a, w2a, w1b, w2b,
                    *, compute_dtype=jnp.bfloat16):
    """Forward pass of the 2-layer GIN graph auto-encoder.

    x:          (N, Din) float32 node features
    edge_index: (2, E)   int32   [source; target]  (messages flow source -> target)
    w1a/w2a/w1b/w2b: torch Linear weights, shape (out, in).
    Returns (N, hidden) float32, row-wise L2-normalized.
    """
    n, din = x.shape
    hidden = w2b.shape[0]

    LANE = 128
    d_pad = _round_up(max(din, hidden, LANE), LANE)        # lane-dense feature dim
    tm = min(256, _round_up(n, 8))                         # row-stripe tile (sublane mult of 8)
    n_pad = _round_up(n, tm)

    # Dense A_hat = A + I, zero-padded to (n_pad, n_pad).
    # A[target, source] += 1 (torch_geometric default flow). Padded nodes only see
    # their own zero features, so padding is inert.
    a = jnp.zeros((n_pad, n_pad), jnp.float32)
    a = a.at[edge_index[1], edge_index[0]].add(1.0)
    a = (a + jnp.eye(n_pad, dtype=jnp.float32)).astype(compute_dtype)

    def pad_to(m, rows, cols):
        out = jnp.zeros((rows, cols), compute_dtype)
        return out.at[: m.shape[0], : m.shape[1]].set(m.astype(compute_dtype))

    x_p = pad_to(x, n_pad, d_pad)
    # Pre-transpose Linear weights: y = x @ W.T  ->  pass W.T, zero-padded to (d_pad, d_pad).
    w1a_p = pad_to(w1a.T, d_pad, d_pad)
    w2a_p = pad_to(w2a.T, d_pad, d_pad)
    w1b_p = pad_to(w1b.T, d_pad, d_pad)
    w2b_p = pad_to(w2b.T, d_pad, d_pad)

    grid = (n_pad // tm,)
    compiler_params = pltpu.CompilerParams(
        dimension_semantics=("parallel",),          # v7x: split row stripes across 2 TCs
        vmem_limit_bytes=48 * 1024 * 1024,          # stays under v7x's 64 MiB physical VMEM
    )

    def run_layer(x_in, w1, w2, *, normalize, out_dtype):
        return pl.pallas_call(
            functools.partial(gin_layer_kernel, normalize=normalize),
            out_shape=jax.ShapeDtypeStruct((n_pad, d_pad), out_dtype),
            grid=grid,
            in_specs=[
                pl.BlockSpec((tm, n_pad), lambda i: (i, 0)),      # A_hat row stripe
                pl.BlockSpec((n_pad, d_pad), lambda i: (0, 0)),   # full x, resident
                pl.BlockSpec((d_pad, d_pad), lambda i: (0, 0)),   # W1.T, resident
                pl.BlockSpec((d_pad, d_pad), lambda i: (0, 0)),   # W2.T, resident
            ],
            out_specs=pl.BlockSpec((tm, d_pad), lambda i: (i, 0)),
            compiler_params=compiler_params,
        )(a, x_in, w1, w2)

    x1 = run_layer(x_p, w1a_p, w2a_p, normalize=False, out_dtype=compute_dtype)
    x2 = run_layer(x1, w1b_p, w2b_p, normalize=True, out_dtype=jnp.float32)

    return x2[:n, :hidden]


def reference_forward(x, edge_index, w1a, w2a, w1b, w2b):
    """Pure-JAX f32 reference mirroring the PyTorch module."""
    n = x.shape[0]
    a = jnp.zeros((n, n), jnp.float32).at[edge_index[1], edge_index[0]].add(1.0)
    a_hat = a + jnp.eye(n, dtype=jnp.float32)

    h = a_hat @ x
    h = jnp.maximum(h @ w1a.T, 0.0) @ w2a.T
    h = a_hat @ h
    h = jnp.maximum(h @ w1b.T, 0.0) @ w2b.T
    norm = jnp.maximum(jnp.linalg.norm(h, axis=1, keepdims=True), 1e-12)
    return h / norm


if __name__ == "__main__":
    N = 16            # number of graph nodes
    INPUT_DIM = 4
    HIDDEN_DIM = 8

    key = jax.random.PRNGKey(0)
    k_x, k1, k2, k3, k4 = jax.random.split(key, 5)

    # Node features
    x = jax.random.normal(k_x, (N, INPUT_DIM), jnp.float32)

    # Simple bidirectional ring graph: edges i -> (i+1) % N and (i+1) % N -> i
    src = jnp.arange(N, dtype=jnp.int32)
    dst = (src + 1) % N
    edge_index = jnp.stack(
        [jnp.concatenate([src, dst]), jnp.concatenate([dst, src])], axis=0
    )  # (2, 2N)

    # torch Linear stores weight as (out, in), bias=False
    w1a = jax.random.normal(k1, (HIDDEN_DIM, INPUT_DIM), jnp.float32) * 0.5   # layer 1, Linear 1
    w2a = jax.random.normal(k2, (HIDDEN_DIM, HIDDEN_DIM), jnp.float32) * 0.5  # layer 1, Linear 2
    w1b = jax.random.normal(k3, (HIDDEN_DIM, HIDDEN_DIM), jnp.float32) * 0.5  # layer 2, Linear 1
    w2b = jax.random.normal(k4, (HIDDEN_DIM, HIDDEN_DIM), jnp.float32) * 0.5  # layer 2, Linear 2

    out = gin_gae_forward(x, edge_index, w1a, w2a, w1b, w2b)
    out = jax.block_until_ready(out)

    ref = reference_forward(x, edge_index, w1a, w2a, w1b, w2b)
    assert out.shape == (N, HIDDEN_DIM)
    # bf16 MXU feeds with f32 accumulation; outputs are unit-norm rows -> loose-ish tol.
    assert jnp.allclose(out, ref, atol=3e-2, rtol=3e-2), "mismatch vs JAX reference"

    print("KERNEL_OK")
</pallas_src>

<mosaic_0001>
module attributes {stable_mosaic.version = 11 : i64} {
  func.func @gin_layer_kernel(%arg0: i32, %arg1: memref<16x16xbf16, #tpu.memory_space<vmem>>, %arg2: memref<16x128xbf16, #tpu.memory_space<vmem>>, %arg3: memref<128x128xbf16, #tpu.memory_space<vmem>>, %arg4: memref<128x128xbf16, #tpu.memory_space<vmem>>, %arg5: memref<16x128xbf16, #tpu.memory_space<vmem>>) attributes {dimension_semantics = [#tpu.dimension_semantics<parallel>], iteration_bounds = array<i64: 1>, scalar_prefetch = 0 : i64, scratch_operands = 0 : i64, tpu.core_type = #tpu.core_type<tc>, window_params = [{transform_indices = @transform_0, window_bounds = array<i64: 16, 16>}, {pipeline_mode = #tpu.pipeline_mode<synchronous>, transform_indices = @transform_1, window_bounds = array<i64: 16, 128>}, {pipeline_mode = #tpu.pipeline_mode<synchronous>, transform_indices = @transform_2, window_bounds = array<i64: 128, 128>}, {pipeline_mode = #tpu.pipeline_mode<synchronous>, transform_indices = @transform_3, window_bounds = array<i64: 128, 128>}, {transform_indices = @transform_4, window_bounds = array<i64: 16, 128>}]} {
    %c0 = arith.constant 0 : index
    %c0_0 = arith.constant 0 : index
    %0 = vector.load %arg1[%c0, %c0_0] : memref<16x16xbf16, #tpu.memory_space<vmem>>, vector<16x16xbf16>
    %c0_1 = arith.constant 0 : index
    %c0_2 = arith.constant 0 : index
    %1 = vector.load %arg2[%c0_1, %c0_2] : memref<16x128xbf16, #tpu.memory_space<vmem>>, vector<16x128xbf16>
    %cst = arith.constant dense<0.000000e+00> : vector<16x128xf32>
    %2 = tpu.matmul %0, %1, %cst {dimension_numbers = #tpu.dot_dimension_numbers<[1], [0], [0], [1], [0, 0, 1, 1], [], []>} : vector<16x16xbf16>, vector<16x128xbf16>, vector<16x128xf32> -> vector<16x128xf32>
    %3 = arith.truncf %2 : vector<16x128xf32> to vector<16x128xbf16>
    %c0_3 = arith.constant 0 : index
    %c0_4 = arith.constant 0 : index
    %4 = vector.load %arg3[%c0_3, %c0_4] : memref<128x128xbf16, #tpu.memory_space<vmem>>, vector<128x128xbf16>
    %cst_5 = arith.constant dense<0.000000e+00> : vector<16x128xf32>
    %5 = tpu.matmul %3, %4, %cst_5 {dimension_numbers = #tpu.dot_dimension_numbers<[1], [0], [0], [1], [0, 0, 1, 1], [], []>} : vector<16x128xbf16>, vector<128x128xbf16>, vector<16x128xf32> -> vector<16x128xf32>
    %cst_6 = arith.constant 0.000000e+00 : f32
    %6 = vector.broadcast %cst_6 : f32 to vector<16x128xf32>
    %7 = arith.maximumf %5, %6 : vector<16x128xf32>
    %8 = arith.truncf %7 : vector<16x128xf32> to vector<16x128xbf16>
    %c0_7 = arith.constant 0 : index
    %c0_8 = arith.constant 0 : index
    %9 = vector.load %arg4[%c0_7, %c0_8] : memref<128x128xbf16, #tpu.memory_space<vmem>>, vector<128x128xbf16>
    %cst_9 = arith.constant dense<0.000000e+00> : vector<16x128xf32>
    %10 = tpu.matmul %8, %9, %cst_9 {dimension_numbers = #tpu.dot_dimension_numbers<[1], [0], [0], [1], [0, 0, 1, 1], [], []>} : vector<16x128xbf16>, vector<128x128xbf16>, vector<16x128xf32> -> vector<16x128xf32>
    %11 = arith.truncf %10 : vector<16x128xf32> to vector<16x128xbf16>
    %c0_10 = arith.constant 0 : index
    %c0_11 = arith.constant 0 : index
    %12 = vector.load %arg5[%c0_10, %c0_11] : memref<16x128xbf16, #tpu.memory_space<vmem>>, vector<16x128xbf16>
    tpu.vector_store %arg5[%c0_10, %c0_11], %11 {strides = array<i32>} : memref<16x128xbf16, #tpu.memory_space<vmem>>, vector<16x128xbf16>,
    return
  }
  func.func @transform_0(%arg0: i32) -> (i32, i32) {
    %c0_i32 = arith.constant 0 : i32
    %c0_i32_0 = arith.constant 0 : i32
    return %arg0, %c0_i32 : i32, i32
  }
  func.func @transform_1(%arg0: i32) -> (i32, i32) {
    %c0_i32 = arith.constant 0 : i32
    %c0_i32_0 = arith.constant 0 : i32
    %c0_i32_1 = arith.constant 0 : i32
    return %c0_i32, %c0_i32_0 : i32, i32
  }
  func.func @transform_2(%arg0: i32) -> (i32, i32) {
    %c0_i32 = arith.constant 0 : i32
    %c0_i32_0 = arith.constant 0 : i32
    %c0_i32_1 = arith.constant 0 : i32
    return %c0_i32, %c0_i32_0 : i32, i32
  }
  func.func @transform_3(%arg0: i32) -> (i32, i32) {
    %c0_i32 = arith.constant 0 : i32
    %c0_i32_0 = arith.constant 0 : i32
    %c0_i32_1 = arith.constant 0 : i32
    return %c0_i32, %c0_i32_0 : i32, i32
  }
  func.func @transform_4(%arg0: i32) -> (i32, i32) {
    %c0_i32 = arith.constant 0 : i32
    %c0_i32_0 = arith.constant 0 : i32
    return %arg0, %c0_i32 : i32, i32
  }
}

</mosaic_0001>

<llo_original>
// kernel: tpu_custom_call.1
$region0: #{tpu_custom_call.1}
  #allocation0 [shape = 'u32[]', space=smem, size = 0x4, offset = 0x4, fixed_abs, tag = 'smem constant byte address 0x4 - core index']
  #allocation1 [shape = 'u32[144,128]{1,0:T(1,128)}', space=vmem, size = 0x12000, scoped, tag = 'internal scratch']
  %s0 = inlined_call_operand.hbm [shape: bf16[16,16], index: 0, kind: input, shape index: {}]
  %s1 = inlined_call_operand.hbm [shape: bf16[16,128], index: 1, kind: input, shape index: {}]
  %s2 = inlined_call_operand.hbm [shape: bf16[128,128], index: 2, kind: input, shape index: {}]
  %s3 = inlined_call_operand.hbm [shape: bf16[128,128], index: 3, kind: input, shape index: {}]
  %s4 = inlined_call_operand.hbm [shape: bf16[16,128], index: 4, kind: output, shape index: {}]
  %s5 = sld [smem:[#allocation0]]
  $region42: #{tpu_custom_call.1} parent=0
    _
  %s7 = ssub.s32 1, %s5
  %s8 = scalar_select 0, %s7, %s5
  $region1: #{tpu_custom_call.1} parent=0
    #allocation2 [shape = 'u8[4096]{0}', space=vmem, size = 0x1000, scoped, tag = 'input window, operand 0, single buffered']
    #allocation3 [shape = 's32[1]{0}', space=sflag, size = 0x4, scoped, tag = 'scoped memory for tpu_custom_call.1']
    #allocation4 [shape = 's32[1]{0}', space=sflag, size = 0x4, scoped, tag = 'scoped memory for tpu_custom_call.1']
    #allocation5 [shape = 'u8[4096]{0}', space=vmem, size = 0x1000, scoped, tag = 'input window, operand 1, single buffered']
    #allocation6 [shape = 's32[1]{0}', space=sflag, size = 0x4, scoped, tag = 'scoped memory for tpu_custom_call.1']
    #allocation7 [shape = 'u8[32768]{0}', space=vmem, size = 0x8000, scoped, tag = 'input window, operand 2, single buffered']
    #allocation8 [shape = 'u8[32768]{0}', space=vmem, size = 0x8000, scoped, tag = 'input window, operand 3, single buffered']
    #allocation9 [shape = 's32[1]{0}', space=sflag, size = 0x4, scoped, tag = 'scoped memory for tpu_custom_call.1']
    #allocation10 [shape = 'u8[4096]{0}', space=vmem, size = 0x1000, scoped, tag = 'output window, operand 0, single buffered']
    %9 = vsyncpa [#allocation3], 0
    %10 = vsyncpa [#allocation6], 0
    %11 = vsyncpa [#allocation9], 0
    %12 = vsyncpa [#allocation4], 0
    // Predicated region
    $region2: #{tpu_custom_call.1} parent=1 // pred_check
      _
    $region3: #{tpu_custom_call.1} parent=1 // pred_check_branch
      %14 = sbr.rel (0) target = $region5
    $region4: #{tpu_custom_call.1} parent=1 // pred_region
      %s16 = ssub.s32 128, 128
      %17 = vsyncadd [#allocation3], %s16
      %s18 = sshll.u32 [#allocation2], 4
      %s19 = int_to_ptr.vmem [resolvable:$true] %s18
      %24 = dma.hbm_to_vmem [thread:$0]  %s0, 128, %s19, [#allocation3], 64, 64, 4
    $region5: #{tpu_custom_call.1} parent=1 // pred_fallthru
      _
    // Predicated region
    $region6: #{tpu_custom_call.1} parent=1 // pred_check
      _
    $region7: #{tpu_custom_call.1} parent=1 // pred_check_branch
      %26 = sbr.rel (0) target = $region9
    $region8: #{tpu_custom_call.1} parent=1 // pred_region
      %s28 = ssub.s32 128, 128
      %29 = vsyncadd [#allocation6], %s28
      %s30 = sshll.u32 [#allocation5], 4
      %s31 = int_to_ptr.vmem [resolvable:$true] %s30
      %36 = dma.hbm_to_vmem [thread:$0]  %s1, 128, %s31, [#allocation6], 64, 64, 4
    $region9: #{tpu_custom_call.1} parent=1 // pred_fallthru
      _
    // Predicated region
    $region10: #{tpu_custom_call.1} parent=1 // pred_check
      _
    $region11: #{tpu_custom_call.1} parent=1 // pred_check_branch
      %38 = sbr.rel (0) target = $region13
    $region12: #{tpu_custom_call.1} parent=1 // pred_region
      %s40 = ssub.s32 1024, 1024
      %41 = vsyncadd [#allocation6], %s40
      %s42 = sshll.u32 [#allocation7], 4
      %s43 = int_to_ptr.vmem [resolvable:$true] %s42
      %48 = dma.hbm_to_vmem [thread:$0]  %s2, 1024, %s43, [#allocation6], 64, 64, 4
    $region13: #{tpu_custom_call.1} parent=1 // pred_fallthru
      _
    // Predicated region
    $region14: #{tpu_custom_call.1} parent=1 // pred_check
      _
    $region15: #{tpu_custom_call.1} parent=1 // pred_check_branch
      %50 = sbr.rel (0) target = $region17
    $region16: #{tpu_custom_call.1} parent=1 // pred_region
      %s52 = ssub.s32 1024, 1024
      %53 = vsyncadd [#allocation9], %s52
      %s54 = sshll.u32 [#allocation8], 4
      %s55 = int_to_ptr.vmem [resolvable:$true] %s54
      %60 = dma.hbm_to_vmem [thread:$0]  %s3, 1024, %s55, [#allocation9], 64, 64, 4
    $region17: #{tpu_custom_call.1} parent=1 // pred_fallthru
      _
    // Predicated region
    $region18: #{tpu_custom_call.1} parent=1 // pred_check
      _
    $region19: #{tpu_custom_call.1} parent=1 // pred_check_branch
      %62 = sbr.rel (0) target = $region21
    $region20: #{tpu_custom_call.1} parent=1 // pred_region
      %63 = dma.done [#allocation3], 128
    $region21: #{tpu_custom_call.1} parent=1 // pred_fallthru
      _
    // Predicated region
    $region22: #{tpu_custom_call.1} parent=1 // pred_check
      _
    $region23: #{tpu_custom_call.1} parent=1 // pred_check_branch
      %65 = sbr.rel (0) target = $region25
    $region24: #{tpu_custom_call.1} parent=1 // pred_region
      %66 = dma.done [#allocation6], 128
    $region25: #{tpu_custom_call.1} parent=1 // pred_fallthru
      _
    // Predicated region
    $region26: #{tpu_custom_call.1} parent=1 // pred_check
      _
    $region27: #{tpu_custom_call.1} parent=1 // pred_check_branch
      %68 = sbr.rel (0) target = $region29
    $region28: #{tpu_custom_call.1} parent=1 // pred_region
      %69 = dma.done [#allocation6], 1024
    $region29: #{tpu_custom_call.1} parent=1 // pred_fallthru
      _
    // Predicated region
    $region30: #{tpu_custom_call.1} parent=1 // pred_check
      _
    $region31: #{tpu_custom_call.1} parent=1 // pred_check_branch
      %71 = sbr.rel (0) target = $region33
    $region32: #{tpu_custom_call.1} parent=1 // pred_region
      %72 = dma.done [#allocation9], 1024
    $region33: #{tpu_custom_call.1} parent=1 // pred_fallthru
      _
    %v74 = vld [vmem:[#allocation2] sm:$0xf]
    %v75 = vld [vmem:[#allocation2 + $0x4] sm:$0xf]
    %v76 = vld [vmem:[#allocation5] sm:$0xf]
    %v77 = vld [vmem:[#allocation5 + $0x4] sm:$0xf]
    %v80 = vunpack.c.l.b16 %v74
    %v81 = vunpack.c.l.b16 %v75
    %v82 = vpack.c.b16 %v81, %v80
    %v85 = vunpack.c.l.b16 %v76
    %v86 = vunpack.c.l.b16 %v77
    %v87 = vpack.c.b16 %v86, %v85
    %vm89 = vcmask 130048
    %v91 = vsel %vm89, %v82, 0
    %93 = vmatprep.subr.bf16.mxu0 0
    %94 = vmatpush1.bf16.msra.mxu0 0
    %95 = vmatprep.subr.bf16.mxu0 0
    %96 = vmatpush1.bf16.msra.mxu0 0
    %97 = vmatprep.subr.bf16.mxu0 0
    %98 = vmatpush1.bf16.msra.mxu0 0
    %99 = vmatprep.subr.bf16.mxu0 0
    %100 = vmatpush1.bf16.msra.mxu0 0
    %101 = vmatprep.subr.bf16.mxu0 0
    %102 = vmatpush1.bf16.msra.mxu0 0
    %103 = vmatprep.subr.bf16.mxu0 0
    %104 = vmatpush1.bf16.msra.mxu0 0
    %105 = vmatprep.subr.bf16.mxu0 0
    %106 = vmatpush1.bf16.msra.mxu0 0
    %107 = vmatprep.subr.bf16.mxu0 0
    %108 = vmatpush1.bf16.msra.mxu0 %v87
    %109 = vmatprep.subr.bf16.mxu0 0
    %110 = vmatpush2.bf16.msra.mxu0 0
    %111 = vmatprep.subr.bf16.mxu0 0
    %112 = vmatpush2.bf16.msra.mxu0 0
    %113 = vmatprep.subr.bf16.mxu0 0
    %114 = vmatpush2.bf16.msra.mxu0 0
    %115 = vmatprep.subr.bf16.mxu0 0
    %116 = vmatpush2.bf16.msra.mxu0 0
    %117 = vmatprep.subr.bf16.mxu0 0
    %118 = vmatpush2.bf16.msra.mxu0 0
    %119 = vmatprep.subr.bf16.mxu0 0
    %120 = vmatpush2.bf16.msra.mxu0 0
    %121 = vmatprep.subr.bf16.mxu0 0
    %122 = vmatpush2.bf16.msra.mxu0 0
    %123 = vmatprep.subr.bf16.mxu0 0
    %124 = vmatpush2.bf16.msra.mxu0 0
    %125 = vmatprep.mubr.bf16.mxu0 0
    %126 = vmatmul.mubr.bf16.gmra.mxu0 %v91
    %v127 = vpop.f32.mrf.mxu0
    %v128 = vadd.f32 0.0, %v127
    %v129 = vpop.f32.mrf.mxu0
    %v130 = vpop.f32.mrf.mxu0
    %v131 = vadd.f32 0.0, %v130
    %v132 = vpop.f32.mrf.mxu0
    %133 = vdwg.mxu0
    %v134 = vpack.c.bf16 %v131, %v128
    %v135 = vld [vmem:[#allocation7] sm:$0xf]
    %v136 = vld [vmem:[#allocation7 + $0x4] sm:$0xf]
    %v137 = vld [vmem:[#allocation7 + $0x8] sm:$0xf]
    %v138 = vld [vmem:[#allocation7 + $0xc] sm:$0xf]
    %v139 = vld [vmem:[#allocation7 + $0x10] sm:$0xf]
    %v140 = vld [vmem:[#allocation7 + $0x14] sm:$0xf]
    %v141 = vld [vmem:[#allocation7 + $0x18] sm:$0xf]
    %v142 = vld [vmem:[#allocation7 + $0x1c] sm:$0xf]
    %v143 = vld [vmem:[#allocation7 + $0x20] sm:$0xf]
    %v144 = vld [vmem:[#allocation7 + $0x24] sm:$0xf]
    %v145 = vld [vmem:[#allocation7 + $0x28] sm:$0xf]
    %v146 = vld [vmem:[#allocation7 + $0x2c] sm:$0xf]
    %v147 = vld [vmem:[#allocation7 + $0x30] sm:$0xf]
    %v148 = vld [vmem:[#allocation7 + $0x34] sm:$0xf]
    %v149 = vld [vmem:[#allocation7 + $0x38] sm:$0xf]
    %v150 = vld [vmem:[#allocation7 + $0x3c] sm:$0xf]
    %v167 = vunpack.c.l.b16 %v135
    %v168 = vunpack.c.l.b16 %v136
    %v169 = vunpack.c.l.b16 %v137
    %v170 = vunpack.c.l.b16 %v138
    %v171 = vunpack.c.l.b16 %v139
    %v172 = vunpack.c.l.b16 %v140
    %v173 = vunpack.c.l.b16 %v141
    %v174 = vunpack.c.l.b16 %v142
    %v175 = vunpack.c.l.b16 %v143
    %v176 = vunpack.c.l.b16 %v144
    %v177 = vunpack.c.l.b16 %v145
    %v178 = vunpack.c.l.b16 %v146
    %v179 = vunpack.c.l.b16 %v147
    %v180 = vunpack.c.l.b16 %v148
    %v181 = vunpack.c.l.b16 %v149
    %v182 = vunpack.c.l.b16 %v150
    %v183 = vpack.c.b16 %v168, %v167
    %v184 = vpack.c.b16 %v170, %v169
    %v185 = vpack.c.b16 %v172, %v171
    %v186 = vpack.c.b16 %v174, %v173
    %v187 = vpack.c.b16 %v176, %v175
    %v188 = vpack.c.b16 %v178, %v177
    %v189 = vpack.c.b16 %v180, %v179
    %v190 = vpack.c.b16 %v182, %v181
    %199 = vmatprep.subr.bf16.mxu0 0
    %200 = vmatpush1.bf16.msra.mxu0 %v190
    %201 = vmatprep.subr.bf16.mxu0 0
    %202 = vmatpush1.bf16.msra.mxu0 %v189
    %203 = vmatprep.subr.bf16.mxu0 0
    %204 = vmatpush1.bf16.msra.mxu0 %v188
    %205 = vmatprep.subr.bf16.mxu0 0
    %206 = vmatpush1.bf16.msra.mxu0 %v187
    %207 = vmatprep.subr.bf16.mxu0 0
    %208 = vmatpush1.bf16.msra.mxu0 %v186
    %209 = vmatprep.subr.bf16.mxu0 0
    %210 = vmatpush1.bf16.msra.mxu0 %v185
    %211 = vmatprep.subr.bf16.mxu0 0
    %212 = vmatpush1.bf16.msra.mxu0 %v184
    %213 = vmatprep.subr.bf16.mxu0 0
    %214 = vmatpush1.bf16.msra.mxu0 %v183
    %215 = vmatprep.subr.bf16.mxu0 0
    %216 = vmatpush2.bf16.msra.mxu0 0
    %217 = vmatprep.subr.bf16.mxu0 0
    %218 = vmatpush2.bf16.msra.mxu0 0
    %219 = vmatprep.subr.bf16.mxu0 0
    %220 = vmatpush2.bf16.msra.mxu0 0
    %221 = vmatprep.subr.bf16.mxu0 0
    %222 = vmatpush2.bf16.msra.mxu0 0
    %223 = vmatprep.subr.bf16.mxu0 0
    %224 = vmatpush2.bf16.msra.mxu0 0
    %225 = vmatprep.subr.bf16.mxu0 0
    %226 = vmatpush2.bf16.msra.mxu0 0
    %227 = vmatprep.subr.bf16.mxu0 0
    %228 = vmatpush2.bf16.msra.mxu0 0
    %229 = vmatprep.subr.bf16.mxu0 0
    %230 = vmatpush2.bf16.msra.mxu0 0
    %231 = vmatprep.mubr.bf16.mxu0 0
    %232 = vmatmul.mubr.bf16.gmra.mxu0 %v134
    %v233 = vpop.f32.mrf.mxu0
    %v234 = vadd.f32 0.0, %v233
    %v235 = vpop.f32.mrf.mxu0
    %v236 = vpop.f32.mrf.mxu0
    %v237 = vadd.f32 0.0, %v236
    %v238 = vpop.f32.mrf.mxu0
    %239 = vdwg.mxu0
    %v240 = vmax.f32 %v234, 0.0
    %v241 = vmax.f32 %v237, 0.0
    %v242 = vpack.c.bf16 %v241, %v240
    %v243 = vld [vmem:[#allocation8] sm:$0xf]
    %v244 = vld [vmem:[#allocation8 + $0x4] sm:$0xf]
    %v245 = vld [vmem:[#allocation8 + $0x8] sm:$0xf]
    %v246 = vld [vmem:[#allocation8 + $0xc] sm:$0xf]
    %v247 = vld [vmem:[#allocation8 + $0x10] sm:$0xf]
    %v248 = vld [vmem:[#allocation8 + $0x14] sm:$0xf]
    %v249 = vld [vmem:[#allocation8 + $0x18] sm:$0xf]
    %v250 = vld [vmem:[#allocation8 + $0x1c] sm:$0xf]
    %v251 = vld [vmem:[#allocation8 + $0x20] sm:$0xf]
    %v252 = vld [vmem:[#allocation8 + $0x24] sm:$0xf]
    %v253 = vld [vmem:[#allocation8 + $0x28] sm:$0xf]
    %v254 = vld [vmem:[#allocation8 + $0x2c] sm:$0xf]
    %v255 = vld [vmem:[#allocation8 + $0x30] sm:$0xf]
    %v256 = vld [vmem:[#allocation8 + $0x34] sm:$0xf]
    %v257 = vld [vmem:[#allocation8 + $0x38] sm:$0xf]
    %v258 = vld [vmem:[#allocation8 + $0x3c] sm:$0xf]
    %v275 = vunpack.c.l.b16 %v243
    %v276 = vunpack.c.l.b16 %v244
    %v277 = vunpack.c.l.b16 %v245
    %v278 = vunpack.c.l.b16 %v246
    %v279 = vunpack.c.l.b16 %v247
    %v280 = vunpack.c.l.b16 %v248
    %v281 = vunpack.c.l.b16 %v249
    %v282 = vunpack.c.l.b16 %v250
    %v283 = vunpack.c.l.b16 %v251
    %v284 = vunpack.c.l.b16 %v252
    %v285 = vunpack.c.l.b16 %v253
    %v286 = vunpack.c.l.b16 %v254
    %v287 = vunpack.c.l.b16 %v255
    %v288 = vunpack.c.l.b16 %v256
    %v289 = vunpack.c.l.b16 %v257
    %v290 = vunpack.c.l.b16 %v258
    %v291 = vpack.c.b16 %v276, %v275
    %v292 = vpack.c.b16 %v278, %v277
    %v293 = vpack.c.b16 %v280, %v279
    %v294 = vpack.c.b16 %v282, %v281
    %v295 = vpack.c.b16 %v284, %v283
    %v296 = vpack.c.b16 %v286, %v285
    %v297 = vpack.c.b16 %v288, %v287
    %v298 = vpack.c.b16 %v290, %v289
    %307 = vmatprep.subr.bf16.mxu0 0
    %308 = vmatpush1.bf16.msra.mxu0 %v298
    %309 = vmatprep.subr.bf16.mxu0 0
    %310 = vmatpush1.bf16.msra.mxu0 %v297
    %311 = vmatprep.subr.bf16.mxu0 0
    %312 = vmatpush1.bf16.msra.mxu0 %v296
    %313 = vmatprep.subr.bf16.mxu0 0
    %314 = vmatpush1.bf16.msra.mxu0 %v295
    %315 = vmatprep.subr.bf16.mxu0 0
    %316 = vmatpush1.bf16.msra.mxu0 %v294
    %317 = vmatprep.subr.bf16.mxu0 0
    %318 = vmatpush1.bf16.msra.mxu0 %v293
    %319 = vmatprep.subr.bf16.mxu0 0
    %320 = vmatpush1.bf16.msra.mxu0 %v292
    %321 = vmatprep.subr.bf16.mxu0 0
    %322 = vmatpush1.bf16.msra.mxu0 %v291
    %323 = vmatprep.subr.bf16.mxu0 0
    %324 = vmatpush2.bf16.msra.mxu0 0
    %325 = vmatprep.subr.bf16.mxu0 0
    %326 = vmatpush2.bf16.msra.mxu0 0
    %327 = vmatprep.subr.bf16.mxu0 0
    %328 = vmatpush2.bf16.msra.mxu0 0
    %329 = vmatprep.subr.bf16.mxu0 0
    %330 = vmatpush2.bf16.msra.mxu0 0
    %331 = vmatprep.subr.bf16.mxu0 0
    %332 = vmatpush2.bf16.msra.mxu0 0
    %333 = vmatprep.subr.bf16.mxu0 0
    %334 = vmatpush2.bf16.msra.mxu0 0
    %335 = vmatprep.subr.bf16.mxu0 0
    %336 = vmatpush2.bf16.msra.mxu0 0
    %337 = vmatprep.subr.bf16.mxu0 0
    %338 = vmatpush2.bf16.msra.mxu0 0
    %339 = vmatprep.mubr.bf16.mxu0 0
    %340 = vmatmul.mubr.bf16.gmra.mxu0 %v242
    %v341 = vpop.f32.mrf.mxu0
    %v342 = vadd.f32 0.0, %v341
    %v343 = vpop.f32.mrf.mxu0
    %v344 = vpop.f32.mrf.mxu0
    %v345 = vadd.f32 0.0, %v344
    %v346 = vpop.f32.mrf.mxu0
    %347 = vdwg.mxu0
    %v348 = vpack.c.bf16 %v345, %v342
    %v350 = vunpack.c.l.b16 %v348
    %v351 = vunpack.c.h.b16 %v348
    %v352 = vpack.c.b16 %v350, %v350
    %v353 = vpack.c.b16 %v351, %v351
    %356 = vst [vmem:[#allocation10] sm:$0xf] %v352
    %357 = vst [vmem:[#allocation10 + $0x4] sm:$0xf] %v353
    // Predicated region
    $region34: #{tpu_custom_call.1} parent=1 // pred_check
      _
    $region35: #{tpu_custom_call.1} parent=1 // pred_check_branch
      %359 = sbr.rel (0) target = $region37
    $region36: #{tpu_custom_call.1} parent=1 // pred_region
      %s361 = ssub.s32 128, 128
      %362 = vsyncadd [#allocation4], %s361
      %s363 = sshll.u32 [#allocation10], 4
      %s364 = int_to_ptr.vmem [resolvable:$true] %s363
      %369 = dma.vmem_to_hbm [thread:$0]  %s364, 128, %s4, [#allocation4], 64, 64, 4
    $region37: #{tpu_custom_call.1} parent=1 // pred_fallthru
      _
    // Predicated region
    $region38: #{tpu_custom_call.1} parent=1 // pred_check
      _
    $region39: #{tpu_custom_call.1} parent=1 // pred_check_branch
      %371 = sbr.rel (0) target = $region41
    $region40: #{tpu_custom_call.1} parent=1 // pred_region
      %372 = dma.done [#allocation4], 128
    $region41: #{tpu_custom_call.1} parent=1 // pred_fallthru
      _
    %373 = vsyncpa [#allocation3], 1
    %374 = vsyncpa [#allocation6], 1
    %375 = vsyncpa [#allocation9], 1
    %376 = vsyncpa [#allocation4], 1

</llo_original>
